<compile_context>
chip_gen: v7x
topology: tpu7x:2x2x1
jax: 0.10.0
libtpu: 0.0.40
codegen_flags: <defaults>
</compile_context>

<pallas_src>
import functools

import numpy as np
import jax
import jax.numpy as jnp
from jax.experimental import pallas as pl
from jax.experimental.pallas import tpu as pltpu

BN_EPS = 1e-3                       # BatchNorm2d(eps=0.001) inside BasicConv2d
_HIGH = jax.lax.Precision.HIGHEST   # reference-side precision

_MAX_TK = 2048                      # K-tile cap (blocks <= ~4 MB, v7x-safe)
_MAX_TM = 512                       # M-tile cap
_VMEM_LIMIT = 48 * 1024 * 1024      # <= v7x 64 MiB physical VMEM


def _round_up(x, m):
    return ((x + m - 1) // m) * m


# -----------------------------------------------------------------------------
# Pallas kernels
# -----------------------------------------------------------------------------
def _mm_bias_act_kernel(x_ref, w_ref, s_ref, o_ref, *, act):
    """Single-K-step fused matmul: o = act(x @ w + s).  No accumulator scratch."""
    y = jnp.dot(x_ref[...], w_ref[...],
                preferred_element_type=jnp.float32) + s_ref[...]
    if act == "relu":
        y = jnp.maximum(y, 0.0)
    o_ref[...] = y


def _mm_bias_act_acc_kernel(x_ref, w_ref, s_ref, o_ref, acc_ref, *, act):
    """K-tiled fused matmul with a VMEM f32 accumulator (init k==0, store k==last)."""
    @pl.when(pl.program_id(2) == 0)
    def _():
        acc_ref[...] = jnp.zeros_like(acc_ref)

    acc_ref[...] += jnp.dot(x_ref[...], w_ref[...],
                            preferred_element_type=jnp.float32)

    @pl.when(pl.program_id(2) == pl.num_programs(2) - 1)
    def _():
        y = acc_ref[...] + s_ref[...]
        if act == "relu":
            y = jnp.maximum(y, 0.0)
        o_ref[...] = y


def _max_window_kernel(p_ref, o_ref):
    """Max-reduce the leading (window) axis of a (k*k, rows, spatial) stack."""
    o_ref[...] = jnp.max(p_ref[...], axis=0)


# -----------------------------------------------------------------------------
# Fused matmul: act(x @ w + shift) with prepared (pre-folded, pre-padded) weights
# -----------------------------------------------------------------------------
def _prep_matmul(w2d, shift, dtype=jnp.float32):
    """One-time weight prep: cast, pad K to the tile grid and Cout to 128 lanes."""
    K, n_out = w2d.shape
    npad = _round_up(n_out, 128)
    nks = -(-K // _MAX_TK)                      # number of K tiles
    tk = _round_up(-(-K // nks), 128)           # balanced K tile
    kp = tk * nks
    if npad % 512 == 0:
        tn = 512
    elif npad % 256 == 0:
        tn = 256
    else:
        tn = 128
    w = jnp.pad(w2d.astype(dtype), ((0, kp - K), (0, npad - n_out)))
    s = jnp.pad(shift.astype(jnp.float32), (0, npad - n_out)).reshape(1, npad)
    return dict(w=w, shift=s, n_out=int(n_out), tk=int(tk), tn=int(tn))


def _fused_matmul(x, prep, act):
    """act(x @ w + shift); x:(M,K), prepared w:(kp,npad), shift:(1,npad)."""
    M, K = x.shape
    w, shift = prep["w"], prep["shift"]
    kp, npad = w.shape
    tk, tn, n_out = prep["tk"], prep["tn"], prep["n_out"]

    m_align = 8 if w.dtype == jnp.float32 else 16
    tm = min(_round_up(M, m_align), _MAX_TM)
    mp = _round_up(M, tm)

    xp = x if x.dtype == w.dtype else x.astype(w.dtype)
    if (mp, kp) != (M, K):
        xp = jnp.pad(xp, ((0, mp - M), (0, kp - K)))

    nks = kp // tk
    if nks == 1:
        kernel = functools.partial(_mm_bias_act_kernel, act=act)
        scratch = []
    else:
        kernel = functools.partial(_mm_bias_act_acc_kernel, act=act)
        scratch = [pltpu.VMEM((tm, tn), jnp.float32)]

    out = pl.pallas_call(
        kernel,
        out_shape=jax.ShapeDtypeStruct((mp, npad), jnp.float32),
        grid_spec=pltpu.PrefetchScalarGridSpec(
            num_scalar_prefetch=0,
            grid=(mp // tm, npad // tn, nks),
            in_specs=[
                pl.BlockSpec((tm, tk), lambda m, n, k: (m, k)),   # activations/patches
                pl.BlockSpec((tk, tn), lambda m, n, k: (k, n)),   # BN-folded weights
                pl.BlockSpec((1, tn), lambda m, n, k: (0, n)),    # packed shift
            ],
            out_specs=pl.BlockSpec((tm, tn), lambda m, n, k: (m, n)),
            scratch_shapes=scratch,
        ),
        compiler_params=pltpu.CompilerParams(
            dimension_semantics=("parallel", "parallel", "arbitrary"),
            vmem_limit_bytes=_VMEM_LIMIT,
        ),
    )(xp, w, shift)

    if (mp, npad) != (M, n_out):
        out = out[:M, :n_out]
    return out


# -----------------------------------------------------------------------------
# Layer wrappers (Pallas path) — im2col / reshapes are layout-only glue
# -----------------------------------------------------------------------------
def _im2col(x, kh, kw, stride, padding):
    n, c, h, w = x.shape
    if padding:
        x = jnp.pad(x, ((0, 0), (0, 0), (padding, padding), (padding, padding)))
    hp, wp = h + 2 * padding, w + 2 * padding
    ho = (hp - kh) // stride + 1
    wo = (wp - kw) // stride + 1
    cols = []
    for i in range(kh):
        for j in range(kw):
            cols.append(x[:, :, i:i + stride * (ho - 1) + 1:stride,
                               j:j + stride * (wo - 1) + 1:stride])
    p = jnp.stack(cols, axis=2)                 # (N, C, kh*kw, Ho, Wo)
    p = p.transpose(0, 3, 4, 1, 2)              # (N, Ho, Wo, C, kh*kw)
    return p.reshape(n * ho * wo, c * kh * kw), ho, wo


def _pallas_conv(x, prep, stride, padding):
    """BasicConv2d (Conv + BN(running stats) + ReLU) with pre-folded weights."""
    patches, ho, wo = _im2col(x, prep["kh"], prep["kw"], stride, padding)
    y = _fused_matmul(patches, prep, act="relu")
    return y.reshape(x.shape[0], ho, wo, prep["n_out"]).transpose(0, 3, 1, 2)


def _pallas_maxpool(x, ksize=3, stride=2):
    """MaxPool2d(3, 2), no padding, floor mode."""
    n, c, h, w = x.shape
    ho = (h - ksize) // stride + 1
    wo = (w - ksize) // stride + 1
    wins = [x[:, :, i:i + stride * (ho - 1) + 1:stride,
                    j:j + stride * (wo - 1) + 1:stride]
            for i in range(ksize) for j in range(ksize)]
    p = jnp.stack(wins, axis=0).reshape(ksize * ksize, n * c, ho * wo)
    rows, sp = n * c, ho * wo
    rp, spp = _round_up(rows, 8), _round_up(sp, 128)        # lane/sublane dense
    if (rp, spp) != (rows, sp):
        p = jnp.pad(p, ((0, 0), (0, rp - rows), (0, spp - sp)))
    out = pl.pallas_call(
        _max_window_kernel,
        out_shape=jax.ShapeDtypeStruct((rp, spp), jnp.float32),
        grid_spec=pltpu.PrefetchScalarGridSpec(
            num_scalar_prefetch=0,
            grid=(1,),
            in_specs=[pl.BlockSpec((ksize * ksize, rp, spp), lambda i: (0, 0, 0))],
            out_specs=pl.BlockSpec((rp, spp), lambda i: (0, 0)),
        ),
        compiler_params=pltpu.CompilerParams(
            dimension_semantics=("arbitrary",)),
    )(p)
    return out[:rows, :sp].reshape(n, c, ho, wo)


def _adaptive_pool_matrix(in_size, out_size):
    m = np.zeros((out_size, in_size), np.float32)
    for p in range(out_size):
        start = (p * in_size) // out_size
        end = -((-(p + 1) * in_size) // out_size)   # ceil
        m[p, start:end] = 1.0 / (end - start)
    return m


def _pallas_adaptive_avgpool(x, out_size=8):
    """AdaptiveAvgPool2d((8, 8)); 1x1 inputs are an exact broadcast."""
    n, c, h, w = x.shape
    if h == 1 and w == 1:
        return jnp.broadcast_to(x, (n, c, out_size, out_size))
    pool_t = jnp.asarray(np.kron(_adaptive_pool_matrix(h, out_size),
                                 _adaptive_pool_matrix(w, out_size)).T)
    prep = _prep_matmul(pool_t, jnp.zeros((out_size * out_size,), jnp.float32))
    y = _fused_matmul(x.reshape(n * c, h * w), prep, act="none")
    return y.reshape(n, c, out_size, out_size)


def _pallas_inception(y, pp):
    s1, s2 = pp["split1"], pp["split2"]
    r = _pallas_conv(y, pp["reduce1x1"], 1, 0)          # fused b1_1 | b5_1 | b3_1
    b1 = _pallas_conv(r[:, :s1], pp["b1_2"], 2, 0)
    b5 = _pallas_conv(r[:, s1:s2], pp["b5_2"], 1, 2)
    b5 = _pallas_conv(b5, pp["b5_3"], 2, 0)
    b3 = _pallas_conv(r[:, s2:], pp["b3_2"], 1, 3)
    b3 = _pallas_conv(b3, pp["b3_3"], 2, 0)
    bp = _pallas_conv(y, pp["bpool"], 2, 0)             # avg_pool(3,2)+1x1 folded in
    return jnp.concatenate([b1, b5, b3, bp], axis=1)


def inception_attention_net_pallas(x, prep):
    y = _pallas_conv(x, prep["stem1"], 2, 0)            # BasicConv2d(3, 16, k7, s2)
    y = _pallas_conv(y, prep["stem2"], 1, 1)            # BasicConv2d(16, 32, k3, p1)
    y = _pallas_maxpool(y)                               # MaxPool2d(3, 2)
    for name in ("inc1", "inc2", "inc3"):
        y = _pallas_inception(y, prep[name])
    y = _pallas_adaptive_avgpool(y)                      # AdaptiveAvgPool2d((8, 8))
    y = y.reshape(y.shape[0], -1)
    y = _fused_matmul(y, prep["fc1"], act="relu")        # Dropout(id) + Linear + ReLU
    y = _fused_matmul(y, prep["fc2"], act="none")        # Dropout(id) + Linear
    return y


# -----------------------------------------------------------------------------
# One-time parameter preparation (BN folding, transposes, padding, bf16 cast)
# -----------------------------------------------------------------------------
def _fold_bn_conv(p):
    w = p["w"]
    cout, cin, kh, kw = w.shape
    scale = p["gamma"] * jax.lax.rsqrt(p["rv"] + BN_EPS)
    shift = p["beta"] - p["rm"] * scale
    w2d = (w.reshape(cout, cin * kh * kw) * scale[:, None]).T   # (K, Cout)
    return w2d, shift, kh, kw


def _prep_conv(p, dtype=jnp.float32):
    w2d, shift, kh, kw = _fold_bn_conv(p)
    prep = _prep_matmul(w2d, shift, dtype)
    prep.update(kh=kh, kw=kw)
    return prep


def _prep_linear(p, dtype=jnp.float32):
    w2d = p["w"].astype(dtype).T                 # one-time transpose (fc1: 128 MB bf16)
    return _prep_matmul(w2d, p["b"], dtype)


def _prep_inception(p):
    parts = [_fold_bn_conv(p[k]) for k in ("b1_1", "b5_1", "b3_1")]
    w_cat = jnp.concatenate([w for w, _, _, _ in parts], axis=1)
    s_cat = jnp.concatenate([s for _, s, _, _ in parts])
    reduce1x1 = _prep_matmul(w_cat, s_cat)
    reduce1x1.update(kh=1, kw=1)
    w0 = int(parts[0][0].shape[1])
    w1 = int(parts[1][0].shape[1])
    # branch_pool: avg_pool2d(3,2) + 1x1 conv == 3x3 stride-2 conv with weights /9
    wb = p["bpool"]["w"]
    w3 = jnp.broadcast_to(wb / 9.0, (wb.shape[0], wb.shape[1], 3, 3))
    bpool = _prep_conv({**p["bpool"], "w": w3})
    return dict(
        reduce1x1=reduce1x1, split1=w0, split2=w0 + w1,
        b1_2=_prep_conv(p["b1_2"]),
        b5_2=_prep_conv(p["b5_2"]),
        b5_3=_prep_conv(p["b5_3"]),
        b3_2=_prep_conv(p["b3_2"]),
        b3_3=_prep_conv(p["b3_3"]),
        bpool=bpool,
    )


def prepare_params(params):
    return dict(
        stem1=_prep_conv(params["stem1"]),
        stem2=_prep_conv(params["stem2"]),
        inc1=_prep_inception(params["inc1"]),
        inc2=_prep_inception(params["inc2"]),
        inc3=_prep_inception(params["inc3"]),
        fc1=_prep_linear(params["fc1"], dtype=jnp.bfloat16),   # bf16 weight stream
        fc2=_prep_linear(params["fc2"], dtype=jnp.float32),
    )


# -----------------------------------------------------------------------------
# Pure-JAX reference (independent lowering) for verification
# -----------------------------------------------------------------------------
def _ref_basic_conv(x, p, stride, padding):
    y = jax.lax.conv_general_dilated(
        x, p["w"], window_strides=(stride, stride),
        padding=[(padding, padding), (padding, padding)],
        dimension_numbers=("NCHW", "OIHW", "NCHW"), precision=_HIGH)
    scale = (p["gamma"] * jax.lax.rsqrt(p["rv"] + BN_EPS))[None, :, None, None]
    y = (y - p["rm"][None, :, None, None]) * scale + p["beta"][None, :, None, None]
    return jnp.maximum(y, 0.0)


def _ref_pool(x, op):
    if op == "max":
        return jax.lax.reduce_window(x, -jnp.inf, jax.lax.max,
                                     (1, 1, 3, 3), (1, 1, 2, 2), "VALID")
    s = jax.lax.reduce_window(x, 0.0, jax.lax.add, (1, 1, 3, 3), (1, 1, 2, 2), "VALID")
    return s / 9.0


def _ref_adaptive_avgpool(x, out_size=8):
    ph = jnp.asarray(_adaptive_pool_matrix(x.shape[2], out_size))
    pw = jnp.asarray(_adaptive_pool_matrix(x.shape[3], out_size))
    return jnp.einsum("pi,ncij,qj->ncpq", ph, x, pw, precision=_HIGH)


def _ref_linear(x, p, act):
    y = jnp.dot(x, p["w"].T, precision=_HIGH) + p["b"]
    return jnp.maximum(y, 0.0) if act == "relu" else y


def _ref_inception(x, p):
    b1 = _ref_basic_conv(x, p["b1_1"], 1, 0)
    b1 = _ref_basic_conv(b1, p["b1_2"], 2, 0)
    b5 = _ref_basic_conv(x, p["b5_1"], 1, 0)
    b5 = _ref_basic_conv(b5, p["b5_2"], 1, 2)
    b5 = _ref_basic_conv(b5, p["b5_3"], 2, 0)
    b3 = _ref_basic_conv(x, p["b3_1"], 1, 0)
    b3 = _ref_basic_conv(b3, p["b3_2"], 1, 3)
    b3 = _ref_basic_conv(b3, p["b3_3"], 2, 0)
    bp = _ref_pool(x, "avg")
    bp = _ref_basic_conv(bp, p["bpool"], 1, 0)
    return jnp.concatenate([b1, b5, b3, bp], axis=1)


def inception_attention_net_reference(x, params):
    y = _ref_basic_conv(x, params["stem1"], 2, 0)
    y = _ref_basic_conv(y, params["stem2"], 1, 1)
    y = _ref_pool(y, "max")
    for name in ("inc1", "inc2", "inc3"):
        y = _ref_inception(y, params[name])
    y = _ref_adaptive_avgpool(y)
    y = y.reshape(y.shape[0], -1)
    y = _ref_linear(y, params["fc1"], "relu")
    y = _ref_linear(y, params["fc2"], "none")
    return y


# -----------------------------------------------------------------------------
# Parameter construction (deterministic, non-trivial BN statistics)
# -----------------------------------------------------------------------------
def _conv_params(key, cout, cin, kh, kw):
    k1, k2, k3, k4, k5 = jax.random.split(key, 5)
    bound = float(np.sqrt(6.0 / (cin * kh * kw)))   # keeps activations O(1) through depth
    return dict(
        w=jax.random.uniform(k1, (cout, cin, kh, kw), jnp.float32, -bound, bound),
        gamma=1.0 + 0.1 * jax.random.normal(k2, (cout,), jnp.float32),
        beta=0.1 * jax.random.normal(k3, (cout,), jnp.float32),
        rm=0.1 * jax.random.normal(k4, (cout,), jnp.float32),
        rv=1.0 + 0.1 * jnp.abs(jax.random.normal(k5, (cout,), jnp.float32)),
    )


def _linear_params(key, out_f, in_f):
    k1, k2 = jax.random.split(key)
    bound = float(1.0 / np.sqrt(in_f))
    return dict(
        w=jax.random.uniform(k1, (out_f, in_f), jnp.float32, -bound, bound),
        b=jax.random.uniform(k2, (out_f,), jnp.float32, -bound, bound),
    )


def _inception_params(key, cin, c_mid, c_out, c_pool):
    ks = jax.random.split(key, 9)
    return dict(
        b1_1=_conv_params(ks[0], c_mid, cin, 1, 1),
        b1_2=_conv_params(ks[1], c_out, c_mid, 3, 3),
        b5_1=_conv_params(ks[2], c_mid, cin, 1, 1),
        b5_2=_conv_params(ks[3], c_out, c_mid, 5, 5),
        b5_3=_conv_params(ks[4], c_out, c_out, 3, 3),
        b3_1=_conv_params(ks[5], c_mid, cin, 1, 1),
        b3_2=_conv_params(ks[6], c_out, c_mid, 7, 7),
        b3_3=_conv_params(ks[7], c_out, c_out, 3, 3),
        bpool=_conv_params(ks[8], c_pool, cin, 1, 1),
    )


def make_params(key, num_classes=2):
    ks = jax.random.split(key, 7)
    return dict(
        stem1=_conv_params(ks[0], 16, 3, 7, 7),
        stem2=_conv_params(ks[1], 32, 16, 3, 3),
        inc1=_inception_params(ks[2], 32, 8, 32, 32),       # Inception_1(32, 32)
        inc2=_inception_params(ks[3], 128, 64, 128, 128),   # Inception_2(128, 128)
        inc3=_inception_params(ks[4], 512, 128, 256, 256),  # Inception_3(512, 256)
        fc1=_linear_params(ks[5], 1024, 1024 * 8 * 8),
        fc2=_linear_params(ks[6], num_classes, 1024),
    )


# -----------------------------------------------------------------------------
if __name__ == "__main__":
    key = jax.random.PRNGKey(0)
    kx, kparam = jax.random.split(key)

    # Smallest square input that survives the stride-2 chain down to Inception_3.
    N, H, W = 2, 72, 72
    x = jax.random.normal(kx, (N, 3, H, W), jnp.float32)
    params = make_params(kparam, num_classes=2)
    prepared = prepare_params(params)           # one-time: BN fold, transpose, pad, bf16

    out = inception_attention_net_pallas(x, prepared)
    out = jax.block_until_ready(out)

    ref = inception_attention_net_reference(x, params)
    ref = jax.block_until_ready(ref)
    np.testing.assert_allclose(np.asarray(out), np.asarray(ref), rtol=5e-3, atol=5e-3)

    print("KERNEL_OK")
</pallas_src>

<mosaic_0001>
module attributes {stable_mosaic.version = 11 : i64} {
  func.func @_mm_bias_act_kernel(%arg0: i32, %arg1: i32, %arg2: i32, %arg3: memref<512x256xf32, #tpu.memory_space<vmem>>, %arg4: memref<256x128xf32, #tpu.memory_space<vmem>>, %arg5: memref<1x128xf32, #tpu.memory_space<vmem>>, %arg6: memref<512x128xf32, #tpu.memory_space<vmem>>) attributes {dimension_semantics = [#tpu.dimension_semantics<parallel>, #tpu.dimension_semantics<parallel>, #tpu.dimension_semantics<arbitrary>], iteration_bounds = array<i64: 5, 1, 1>, scalar_prefetch = 0 : i64, scratch_operands = 0 : i64, tpu.core_type = #tpu.core_type<tc>, window_params = [{transform_indices = @transform_0, window_bounds = array<i64: 512, 256>}, {transform_indices = @transform_1, window_bounds = array<i64: 256, 128>}, {transform_indices = @transform_2, window_bounds = array<i64: 1, 128>}, {transform_indices = @transform_3, window_bounds = array<i64: 512, 128>}]} {
    %c0 = arith.constant 0 : index
    %c0_0 = arith.constant 0 : index
    %0 = vector.load %arg3[%c0, %c0_0] : memref<512x256xf32, #tpu.memory_space<vmem>>, vector<512x256xf32>
    %c0_1 = arith.constant 0 : index
    %c0_2 = arith.constant 0 : index
    %1 = vector.load %arg4[%c0_1, %c0_2] : memref<256x128xf32, #tpu.memory_space<vmem>>, vector<256x128xf32>
    %cst = arith.constant dense<0.000000e+00> : vector<512x128xf32>
    %2 = tpu.matmul %0, %1, %cst {dimension_numbers = #tpu.dot_dimension_numbers<[1], [0], [0], [1], [0, 0, 1, 1], [], []>} : vector<512x256xf32>, vector<256x128xf32>, vector<512x128xf32> -> vector<512x128xf32>
    %c0_3 = arith.constant 0 : index
    %c0_4 = arith.constant 0 : index
    %3 = vector.load %arg5[%c0_3, %c0_4] : memref<1x128xf32, #tpu.memory_space<vmem>>, vector<1x128xf32>
    %4 = vector.broadcast %3 : vector<1x128xf32> to vector<512x128xf32>
    %5 = arith.addf %2, %4 : vector<512x128xf32>
    %cst_5 = arith.constant 0.000000e+00 : f32
    %6 = vector.broadcast %cst_5 : f32 to vector<512x128xf32>
    %7 = arith.maximumf %5, %6 : vector<512x128xf32>
    %c0_6 = arith.constant 0 : index
    %c0_7 = arith.constant 0 : index
    %8 = vector.load %arg6[%c0_6, %c0_7] : memref<512x128xf32, #tpu.memory_space<vmem>>, vector<512x128xf32>
    tpu.vector_store %arg6[%c0_6, %c0_7], %7 {strides = array<i32>} : memref<512x128xf32, #tpu.memory_space<vmem>>, vector<512x128xf32>,
    return
  }
  func.func @transform_0(%arg0: i32, %arg1: i32, %arg2: i32) -> (i32, i32) {
    %c0_i32 = arith.constant 0 : i32
    return %arg0, %arg2 : i32, i32
  }
  func.func @transform_1(%arg0: i32, %arg1: i32, %arg2: i32) -> (i32, i32) {
    %c0_i32 = arith.constant 0 : i32
    return %arg2, %arg1 : i32, i32
  }
  func.func @transform_2(%arg0: i32, %arg1: i32, %arg2: i32) -> (i32, i32) {
    %c0_i32 = arith.constant 0 : i32
    %c0_i32_0 = arith.constant 0 : i32
    return %c0_i32, %arg1 : i32, i32
  }
  func.func @transform_3(%arg0: i32, %arg1: i32, %arg2: i32) -> (i32, i32) {
    %c0_i32 = arith.constant 0 : i32
    return %arg0, %arg1 : i32, i32
  }
}

</mosaic_0001>

<llo_original>
// kernel: tpu_custom_call.1
$region0: #{tpu_custom_call.1}
  #allocation0 [shape = 'u32[]', space=smem, size = 0x4, offset = 0x4, fixed_abs, tag = 'smem constant byte address 0x4 - core index']
  #allocation1 [shape = 'u32[144,128]{1,0:T(1,128)}', space=vmem, size = 0x12000, scoped, tag = 'internal scratch']
  %s0 = inlined_call_operand.hbm [shape: f32[2560,256], index: 0, kind: input, shape index: {}]
  %s1 = inlined_call_operand.hbm [shape: f32[256,128], index: 1, kind: input, shape index: {}]
  %s2 = inlined_call_operand.hbm [shape: f32[1,128], index: 2, kind: input, shape index: {}]
  %s3 = inlined_call_operand.hbm [shape: f32[2560,128], index: 3, kind: output, shape index: {}]
  %s4 = sld [smem:[#allocation0]]
  $region57: #{tpu_custom_call.1} parent=0
    _
  %s6 = ssub.s32 1, %s4
  %s7 = scalar_select 0, %s6, %s4
  $region1: #{tpu_custom_call.1} parent=0
    #allocation2 [shape = 'u8[1048576]{0}', space=vmem, size = 0x100000, scoped, tag = 'input window, operand 0']
    #allocation3 [shape = 's32[2]{0}', space=sflag, size = 0x8, scoped, tag = 'scoped memory for tpu_custom_call.1']
    #allocation4 [shape = 's32[2]{0}', space=sflag, size = 0x8, scoped, tag = 'scoped memory for tpu_custom_call.1']
    #allocation5 [shape = 'u8[131072]{0}', space=vmem, size = 0x20000, scoped, tag = 'input window, operand 1, single buffered']
    #allocation6 [shape = 's32[1]{0}', space=sflag, size = 0x4, scoped, tag = 'scoped memory for tpu_custom_call.1']
    #allocation7 [shape = 'u8[512]{0}', space=vmem, size = 0x400, scoped, tag = 'input window, operand 2, single buffered']
    #allocation8 [shape = 'u8[524288]{0}', space=vmem, size = 0x80000, scoped, tag = 'output window, operand 0']
    %8 = vsyncpa [#allocation3], 0
    %s9 = scalar_lea.sflag [#allocation3], 1
    %10 = vsyncpa %s9, 0
    %11 = vsyncpa [#allocation6], 0
    %12 = vsyncpa [#allocation4], 0
    %s13 = scalar_lea.sflag [#allocation4], 1
    %14 = vsyncpa %s13, 0
    loop: start=0, step=1, limit=7
    $region2: #{tpu_custom_call.1} parent=1 // loop_pre_header
      _
    $region3: #{tpu_custom_call.1} parent=1 // loop_header
      %s16 = sphi 0, %s20
      %p17 = scmp.ge.s32.totalorder %s16, 7
      %s23 = sphi 0, %s42
      %s24 = sphi 0, %s38
      %s25 = sphi 0, %s34
      %s26 = sphi 0, %s23
      %s27 = sphi 0, %s24
      %s28 = sphi 0, %s25
      %s29 = sphi 0, %s26
      %s30 = sphi 0, %s27
      %s31 = sphi 0, %s28
      %s47 = sphi 0, %s49
      %s50 = sphi 0, %s47
      %s51 = sphi 0, %s50
      %s67 = sphi 0, %s51
      %s75 = sphi 0, %s77
      %s78 = sphi 0, %s75
      %s79 = sphi 0, %s78
      %s95 = sphi 0, %s79
      %s101 = sphi 0, %s103
      %s104 = sphi 0, %s101
      %s105 = sphi 0, %s104
      %s121 = sphi 0, %s105
      %s129 = sphi 0, %s131
      %s132 = sphi 0, %s129
      %s133 = sphi 0, %s132
      %s149 = sphi 0, %s133
    $region4: #{tpu_custom_call.1} parent=1 // loop_header_branch
      %19 = sbr.rel (%p17) target = $region8
    $region5: #{tpu_custom_call.1} parent=1 // loop_body
      %s21 = ssub.s32 %s16, 1
      %s22 = ssub.s32 %s16, 2
      %s32 = sadd.s32 1, %s25
      %p33 = scmp.ge.s32.totalorder %s32, 1
      %s34 = scalar_select %p33, 0, %s32
      %s35 = sadd.s32 1, %s24
      %s36 = scalar_select %p33, %s35, %s24
      %p37 = scmp.ge.s32.totalorder %s36, 1
      %s38 = scalar_select %p37, 0, %s36
      %s39 = sadd.s32 1, %s23
      %s40 = scalar_select %p37, %s39, %s23
      %p41 = scmp.ge.s32.totalorder %s40, 5
      %s42 = scalar_select %p41, 0, %s40
      %s43 = ssub.s32 %s23, %s42
      %s44 = ssub.s32 %s25, %s34
      %s45 = sor.u32 %s43, %s44
      %p46 = scmp.eq.s32.totalorder %s45, 0
      %s48 = sadd.s32 %s47, 1
      %s49 = scalar_select %p46, %s47, %s48
      %p52 = pneg %p46
      %p53 = scmp.eq.s32.totalorder %s16, 4
      %p54 = por %p52, %p53
      %p55 = scmp.ne.s32.totalorder %s47, %s50
      %p56 = scmp.eq.s32.totalorder %s16, 0
      %p57 = por %p55, %p56
      %p58 = scmp.ne.s32.totalorder %s47, %s50
      %p59 = scmp.eq.s32.totalorder %s21, 4
      %p60 = por %p58, %p59
      %p61 = scmp.ne.s32.totalorder %s50, %s51
      %p62 = scmp.eq.s32.totalorder %s21, 0
      %p63 = por %p61, %p62
      %p64 = scmp.ne.s32.totalorder %s50, %s51
      %p65 = scmp.eq.s32.totalorder %s22, 4
      %p66 = por %p64, %p65
      %p68 = scmp.ne.s32.totalorder %s51, %s67
      %p69 = scmp.eq.s32.totalorder %s22, 0
      %p70 = por %p68, %p69
      %s71 = ssub.s32 %s25, %s34
      %s72 = ssub.s32 %s24, %s38
      %s73 = sor.u32 %s71, %s72
      %p74 = scmp.eq.s32.totalorder %s73, 0
      %s76 = sadd.s32 %s75, 1
      %s77 = scalar_select %p74, %s75, %s76
      %p80 = pneg %p74
      %p81 = scmp.eq.s32.totalorder %s16, 4
      %p82 = por %p80, %p81
      %p83 = scmp.ne.s32.totalorder %s75, %s78
      %p84 = scmp.eq.s32.totalorder %s16, 0
      %p85 = por %p83, %p84
      %p86 = scmp.ne.s32.totalorder %s75, %s78
      %p87 = scmp.eq.s32.totalorder %s21, 4
      %p88 = por %p86, %p87
      %p89 = scmp.ne.s32.totalorder %s78, %s79
      %p90 = scmp.eq.s32.totalorder %s21, 0
      %p91 = por %p89, %p90
      %p92 = scmp.ne.s32.totalorder %s78, %s79
      %p93 = scmp.eq.s32.totalorder %s22, 4
      %p94 = por %p92, %p93
      %p96 = scmp.ne.s32.totalorder %s79, %s95
      %p97 = scmp.eq.s32.totalorder %s22, 0
      %p98 = por %p96, %p97
      %s99 = ssub.s32 %s24, %s38
      %p100 = scmp.eq.s32.totalorder %s99, 0
      %s102 = sadd.s32 %s101, 1
      %s103 = scalar_select %p100, %s101, %s102
      %p106 = pneg %p100
      %p107 = scmp.eq.s32.totalorder %s16, 4
      %p108 = por %p106, %p107
      %p109 = scmp.ne.s32.totalorder %s101, %s104
      %p110 = scmp.eq.s32.totalorder %s16, 0
      %p111 = por %p109, %p110
      %p112 = scmp.ne.s32.totalorder %s101, %s104
      %p113 = scmp.eq.s32.totalorder %s21, 4
      %p114 = por %p112, %p113
      %p115 = scmp.ne.s32.totalorder %s104, %s105
      %p116 = scmp.eq.s32.totalorder %s21, 0
      %p117 = por %p115, %p116
      %p118 = scmp.ne.s32.totalorder %s104, %s105
      %p119 = scmp.eq.s32.totalorder %s22, 4
      %p120 = por %p118, %p119
      %p122 = scmp.ne.s32.totalorder %s105, %s121
      %p123 = scmp.eq.s32.totalorder %s22, 0
      %p124 = por %p122, %p123
      %s125 = ssub.s32 %s23, %s42
      %s126 = ssub.s32 %s24, %s38
      %s127 = sor.u32 %s125, %s126
      %p128 = scmp.eq.s32.totalorder %s127, 0
      %s130 = sadd.s32 %s129, 1
      %s131 = scalar_select %p128, %s129, %s130
      %p134 = pneg %p128
      %p135 = scmp.eq.s32.totalorder %s16, 4
      %p136 = por %p134, %p135
      %p137 = scmp.ne.s32.totalorder %s129, %s132
      %p138 = scmp.eq.s32.totalorder %s16, 0
      %p139 = por %p137, %p138
      %p140 = scmp.ne.s32.totalorder %s129, %s132
      %p141 = scmp.eq.s32.totalorder %s21, 4
      %p142 = por %p140, %p141
      %p143 = scmp.ne.s32.totalorder %s132, %s133
      %p144 = scmp.eq.s32.totalorder %s21, 0
      %p145 = por %p143, %p144
      %p146 = scmp.ne.s32.totalorder %s132, %s133
      %p147 = scmp.eq.s32.totalorder %s22, 4
      %p148 = por %p146, %p147
      %p150 = scmp.ne.s32.totalorder %s133, %s149
      %p151 = scmp.eq.s32.totalorder %s22, 0
      %p152 = por %p150, %p151
      %p153 = scmp.le.s32.totalorder 1, %s16
      %p154 = scmp.lt.s32.totalorder %s16, 6
      %p155 = pnand %p153, %p154
      %p156 = pneg %p155
      // Predicated region
      $region9: #{tpu_custom_call.1} parent=5 // pred_check
        _
      $region10: #{tpu_custom_call.1} parent=5 // pred_check_branch
        %158 = sbr.rel (%p155) target = $region12
      $region11: #{tpu_custom_call.1} parent=5 // pred_region
        %s159 = ssub.s32 %s16, 1
        // Predicated region
        $region13: #{tpu_custom_call.1} parent=11 // pred_check
          %p160 = pneg %p91
        $region14: #{tpu_custom_call.1} parent=11 // pred_check_branch
          %162 = sbr.rel (%p160) target = $region16
        $region15: #{tpu_custom_call.1} parent=11 // pred_region
          %s163 = smul.u32 32, %s28
          %s165 = ssub.s32 4096, 4096
          %166 = vsyncadd [#allocation6], %s165
          %s167 = sadd.s32 %s27, %s163
          %s168 = smul.addr %s167, 128
          %s169 = scalar_lea.hbm %s1, %s168
          %s170 = sshll.u32 [#allocation5], 4
          %s171 = int_to_ptr.vmem [resolvable:$true] %s170
          %176 = dma.hbm_to_vmem [thread:$0]  %s169, 4096, %s171, [#allocation6], 128, 128, 8
        $region16: #{tpu_custom_call.1} parent=11 // pred_fallthru
          _
        // Predicated region
        $region17: #{tpu_custom_call.1} parent=11 // pred_check
          %p177 = pneg %p117
        $region18: #{tpu_custom_call.1} parent=11 // pred_check_branch
          %179 = sbr.rel (%p177) target = $region20
        $region19: #{tpu_custom_call.1} parent=11 // pred_region
          %s181 = ssub.s32 16, 16
          %182 = vsyncadd [#allocation6], %s181
          %s183 = smul.addr %s27, 16
          %s184 = scalar_lea.hbm %s2, %s183
          %s186 = sshll.u32 [#allocation7], 4
          %s187 = int_to_ptr.vmem [resolvable:$true] %s186
          %189 = dma.hbm_to_vmem [thread:$0]  %s184, 16, %s187, [#allocation6]
        $region20: #{tpu_custom_call.1} parent=11 // pred_fallthru
          _
      $region12: #{tpu_custom_call.1} parent=5 // pred_fallthru
        _
      %p190 = scmp.lt.s32.totalorder %s16, 5
      // Predicated region
      $region21: #{tpu_custom_call.1} parent=5 // pred_check
        %p191 = pneg %p190
      $region22: #{tpu_custom_call.1} parent=5 // pred_check_branch
        %193 = sbr.rel (%p191) target = $region24
      $region23: #{tpu_custom_call.1} parent=5 // pred_region
        // Predicated region
        $region25: #{tpu_custom_call.1} parent=23 // pred_check
          %p194 = pneg %p57
        $region26: #{tpu_custom_call.1} parent=23 // pred_check_branch
          %196 = sbr.rel (%p194) target = $region28
        $region27: #{tpu_custom_call.1} parent=23 // pred_region
          %s197 = sand.u32 %s47, 1
          %s198 = scalar_lea.sflag [#allocation3], %s197
          %s199 = sand.u32 %s47, 1
          %s200 = smul.addr %s199, 1024
          %s201 = scalar_lea.vmem [#allocation2], %s200
          %s202 = smul.u32 64, %s23
          %s203 = smul.u32 2, %s25
          %s205 = ssub.s32 16384, 16384
          %206 = vsyncadd %s198, %s205
          %s207 = smul.addr %s202, 2
          %s208 = sadd.s32 %s203, %s207
          %s209 = smul.addr %s208, 128
          %s210 = scalar_lea.hbm %s0, %s209
          %s211 = sshll.u32 %s201, 4
          %s212 = int_to_ptr.vmem [resolvable:$true] %s211
          %217 = dma.hbm_to_vmem [thread:$0]  %s210, 16384, %s212, %s198, 256, 256, 16
        $region28: #{tpu_custom_call.1} parent=23 // pred_fallthru
          _
      $region24: #{tpu_custom_call.1} parent=5 // pred_fallthru
        _
      %p218 = scmp.le.s32.totalorder 1, %s16
      %p219 = scmp.lt.s32.totalorder %s16, 6
      %p220 = pnand %p218, %p219
      %p221 = pneg %p220
      // Predicated region
      $region29: #{tpu_custom_call.1} parent=5 // pred_check
        _
      $region30: #{tpu_custom_call.1} parent=5 // pred_check_branch
        %223 = sbr.rel (%p220) target = $region32
      $region31: #{tpu_custom_call.1} parent=5 // pred_region
        %s224 = ssub.s32 %s16, 1
        %s225 = sand.u32 %s50, 1
        %s226 = scalar_lea.sflag [#allocation3], %s225
        %s227 = sand.u32 %s50, 1
        %s228 = smul.addr %s227, 1024
        %s229 = scalar_lea.vmem [#allocation2], %s228
        // Predicated region
        $region33: #{tpu_custom_call.1} parent=31 // pred_check
          %p230 = pneg %p63
        $region34: #{tpu_custom_call.1} parent=31 // pred_check_branch
          %232 = sbr.rel (%p230) target = $region36
        $region35: #{tpu_custom_call.1} parent=31 // pred_region
          %233 = dma.done %s226, 16384
        $region36: #{tpu_custom_call.1} parent=31 // pred_fallthru
          _
        // Predicated region
        $region37: #{tpu_custom_call.1} parent=31 // pred_check
          %p234 = pneg %p91
        $region38: #{tpu_custom_call.1} parent=31 // pred_check_branch
          %236 = sbr.rel (%p234) target = $region40
        $region39: #{tpu_custom_call.1} parent=31 // pred_region
          %237 = dma.done [#allocation6], 4096
        $region40: #{tpu_custom_call.1} parent=31 // pred_fallthru
          _
        // Predicated region
        $region41: #{tpu_custom_call.1} parent=31 // pred_check
          %p238 = pneg %p117
        $region42: #{tpu_custom_call.1} parent=31 // pred_check_branch
          %240 = sbr.rel (%p238) target = $region44
        $region43: #{tpu_custom_call.1} parent=31 // pred_region
          %241 = dma.done [#allocation6], 16
        $region44: #{tpu_custom_call.1} parent=31 // pred_fallthru
          _
        %s242 = sand.u32 %s50, 1
        %s243 = scalar_lea.sflag [#allocation3], %s242
        %s244 = sand.u32 %s50, 1
        %s245 = smul.addr %s244, 1024
        %s246 = scalar_lea.vmem [#allocation2], %s245
        %p247 = pneg %p63
        %p248 = pneg %p60
        %p249 = pneg %p91
        %p250 = pneg %p88
        %p251 = pneg %p117
        %p252 = pneg %p114
        %p253 = pneg %p145
        %p254 = pneg %p142
        %s255 = sand.u32 %s132, 1
        %s256 = scalar_lea.sflag [#allocation4], %s255
        %s257 = sand.u32 %s132, 1
        %s258 = smul.addr %s257, 512
        %s259 = scalar_lea.vmem [#allocation8], %s258
        %s260 = smul.u32 64, %s26
        %s261 = smul.u32 2, %s28
        %s262 = smul.u32 32, %s28
        %s263 = smul.u32 64, %s26
        %v264 = vld [vmem:[%s229] sm:$0xff]
        %v265 = vld [vmem:[%s229 + $0x8] sm:$0xff]
        %v266 = vld [vmem:[%s229 + $0x10] sm:$0xff]
        %v267 = vld [vmem:[%s229 + $0x18] sm:$0xff]
        %v268 = vld [vmem:[%s229 + $0x20] sm:$0xff]
        %v269 = vld [vmem:[%s229 + $0x28] sm:$0xff]
        %v270 = vld [vmem:[%s229 + $0x30] sm:$0xff]
        %v271 = vld [vmem:[%s229 + $0x38] sm:$0xff]
        %v272 = vld [vmem:[%s229 + $0x40] sm:$0xff]
        %v273 = vld [vmem:[%s229 + $0x48] sm:$0xff]
        %v274 = vld [vmem:[%s229 + $0x50] sm:$0xff]
        %v275 = vld [vmem:[%s229 + $0x58] sm:$0xff]
        %v276 = vld [vmem:[%s229 + $0x60] sm:$0xff]
        %v277 = vld [vmem:[%s229 + $0x68] sm:$0xff]
        %v278 = vld [vmem:[%s229 + $0x70] sm:$0xff]
        %v279 = vld [vmem:[%s229 + $0x78] sm:$0xff]
        %v280 = vld [vmem:[%s229 + $0x80] sm:$0xff]
        %v281 = vld [vmem:[%s229 + $0x88] sm:$0xff]
        %v282 = vld [vmem:[%s229 + $0x90] sm:$0xff]
        %v283 = vld [vmem:[%s229 + $0x98] sm:$0xff]
        %v284 = vld [vmem:[%s229 + $0xa0] sm:$0xff]
        %v285 = vld [vmem:[%s229 + $0xa8] sm:$0xff]
        %v286 = vld [vmem:[%s229 + $0xb0] sm:$0xff]
        %v287 = vld [vmem:[%s229 + $0xb8] sm:$0xff]
        %v288 = vld [vmem:[%s229 + $0xc0] sm:$0xff]
        %v289 = vld [vmem:[%s229 + $0xc8] sm:$0xff]
        %v290 = vld [vmem:[%s229 + $0xd0] sm:$0xff]
        %v291 = vld [vmem:[%s229 + $0xd8] sm:$0xff]
        %v292 = vld [vmem:[%s229 + $0xe0] sm:$0xff]
        %v293 = vld [vmem:[%s229 + $0xe8] sm:$0xff]
        %v294 = vld [vmem:[%s229 + $0xf0] sm:$0xff]
        %v295 = vld [vmem:[%s229 + $0xf8] sm:$0xff]
        %v296 = vld [vmem:[%s229 + $0x100] sm:$0xff]
        %v297 = vld [vmem:[%s229 + $0x108] sm:$0xff]
        %v298 = vld [vmem:[%s229 + $0x110] sm:$0xff]
        %v299 = vld [vmem:[%s229 + $0x118] sm:$0xff]
        %v300 = vld [vmem:[%s229 + $0x120] sm:$0xff]
        %v301 = vld [vmem:[%s229 + $0x128] sm:$0xff]
        %v302 = vld [vmem:[%s229 + $0x130] sm:$0xff]
        %v303 = vld [vmem:[%s229 + $0x138] sm:$0xff]
        %v304 = vld [vmem:[%s229 + $0x140] sm:$0xff]
        %v305 = vld [vmem:[%s229 + $0x148] sm:$0xff]
        %v306 = vld [vmem:[%s229 + $0x150] sm:$0xff]
        %v307 = vld [vmem:[%s229 + $0x158] sm:$0xff]
        %v308 = vld [vmem:[%s229 + $0x160] sm:$0xff]
        %v309 = vld [vmem:[%s229 + $0x168] sm:$0xff]
        %v310 = vld [vmem:[%s229 + $0x170] sm:$0xff]
        %v311 = vld [vmem:[%s229 + $0x178] sm:$0xff]
        %v312 = vld [vmem:[%s229 + $0x180] sm:$0xff]
        %v313 = vld [vmem:[%s229 + $0x188] sm:$0xff]
        %v314 = vld [vmem:[%s229 + $0x190] sm:$0xff]
        %v315 = vld [vmem:[%s229 + $0x198] sm:$0xff]
        %v316 = vld [vmem:[%s229 + $0x1a0] sm:$0xff]
        %v317 = vld [vmem:[%s229 + $0x1a8] sm:$0xff]
        %v318 = vld [vmem:[%s229 + $0x1b0] sm:$0xff]
        %v319 = vld [vmem:[%s229 + $0x1b8] sm:$0xff]
        %v320 = vld [vmem:[%s229 + $0x1c0] sm:$0xff]
        %v321 = vld [vmem:[%s229 + $0x1c8] sm:$0xff]
        %v322 = vld [vmem:[%s229 + $0x1d0] sm:$0xff]
        %v323 = vld [vmem:[%s229 + $0x1d8] sm:$0xff]
        %v324 = vld [vmem:[%s229 + $0x1e0] sm:$0xff]
        %v325 = vld [vmem:[%s229 + $0x1e8] sm:$0xff]
        %v326 = vld [vmem:[%s229 + $0x1f0] sm:$0xff]
        %v327 = vld [vmem:[%s229 + $0x1f8] sm:$0xff]
        %v328 = vld [vmem:[%s229 + $0x200] sm:$0xff]
        %v329 = vld [vmem:[%s229 + $0x208] sm:$0xff]
        %v330 = vld [vmem:[%s229 + $0x210] sm:$0xff]
        %v331 = vld [vmem:[%s229 + $0x218] sm:$0xff]
        %v332 = vld [vmem:[%s229 + $0x220] sm:$0xff]
        %v333 = vld [vmem:[%s229 + $0x228] sm:$0xff]
        %v334 = vld [vmem:[%s229 + $0x230] sm:$0xff]
        %v335 = vld [vmem:[%s229 + $0x238] sm:$0xff]
        %v336 = vld [vmem:[%s229 + $0x240] sm:$0xff]
        %v337 = vld [vmem:[%s229 + $0x248] sm:$0xff]
        %v338 = vld [vmem:[%s229 + $0x250] sm:$0xff]
        %v339 = vld [vmem:[%s229 + $0x258] sm:$0xff]
        %v340 = vld [vmem:[%s229 + $0x260] sm:$0xff]
        %v341 = vld [vmem:[%s229 + $0x268] sm:$0xff]
        %v342 = vld [vmem:[%s229 + $0x270] sm:$0xff]
        %v343 = vld [vmem:[%s229 + $0x278] sm:$0xff]
        %v344 = vld [vmem:[%s229 + $0x280] sm:$0xff]
        %v345 = vld [vmem:[%s229 + $0x288] sm:$0xff]
        %v346 = vld [vmem:[%s229 + $0x290] sm:$0xff]
        %v347 = vld [vmem:[%s229 + $0x298] sm:$0xff]
        %v348 = vld [vmem:[%s229 + $0x2a0] sm:$0xff]
        %v349 = vld [vmem:[%s229 + $0x2a8] sm:$0xff]
        %v350 = vld [vmem:[%s229 + $0x2b0] sm:$0xff]
        %v351 = vld [vmem:[%s229 + $0x2b8] sm:$0xff]
        %v352 = vld [vmem:[%s229 + $0x2c0] sm:$0xff]
        %v353 = vld [vmem:[%s229 + $0x2c8] sm:$0xff]
        %v354 = vld [vmem:[%s229 + $0x2d0] sm:$0xff]
        %v355 = vld [vmem:[%s229 + $0x2d8] sm:$0xff]
        %v356 = vld [vmem:[%s229 + $0x2e0] sm:$0xff]
        %v357 = vld [vmem:[%s229 + $0x2e8] sm:$0xff]
        %v358 = vld [vmem:[%s229 + $0x2f0] sm:$0xff]
        %v359 = vld [vmem:[%s229 + $0x2f8] sm:$0xff]
        %v360 = vld [vmem:[%s229 + $0x300] sm:$0xff]
        %v361 = vld [vmem:[%s229 + $0x308] sm:$0xff]
        %v362 = vld [vmem:[%s229 + $0x310] sm:$0xff]
        %v363 = vld [vmem:[%s229 + $0x318] sm:$0xff]
        %v364 = vld [vmem:[%s229 + $0x320] sm:$0xff]
        %v365 = vld [vmem:[%s229 + $0x328] sm:$0xff]
        %v366 = vld [vmem:[%s229 + $0x330] sm:$0xff]
        %v367 = vld [vmem:[%s229 + $0x338] sm:$0xff]
        %v368 = vld [vmem:[%s229 + $0x340] sm:$0xff]
        %v369 = vld [vmem:[%s229 + $0x348] sm:$0xff]
        %v370 = vld [vmem:[%s229 + $0x350] sm:$0xff]
        %v371 = vld [vmem:[%s229 + $0x358] sm:$0xff]
        %v372 = vld [vmem:[%s229 + $0x360] sm:$0xff]
        %v373 = vld [vmem:[%s229 + $0x368] sm:$0xff]
        %v374 = vld [vmem:[%s229 + $0x370] sm:$0xff]
        %v375 = vld [vmem:[%s229 + $0x378] sm:$0xff]
        %v376 = vld [vmem:[%s229 + $0x380] sm:$0xff]
        %v377 = vld [vmem:[%s229 + $0x388] sm:$0xff]
        %v378 = vld [vmem:[%s229 + $0x390] sm:$0xff]
        %v379 = vld [vmem:[%s229 + $0x398] sm:$0xff]
        %v380 = vld [vmem:[%s229 + $0x3a0] sm:$0xff]
        %v381 = vld [vmem:[%s229 + $0x3a8] sm:$0xff]
        %v382 = vld [vmem:[%s229 + $0x3b0] sm:$0xff]
        %v383 = vld [vmem:[%s229 + $0x3b8] sm:$0xff]
        %v384 = vld [vmem:[%s229 + $0x3c0] sm:$0xff]
        %v385 = vld [vmem:[%s229 + $0x3c8] sm:$0xff]
        %v386 = vld [vmem:[%s229 + $0x3d0] sm:$0xff]
        %v387 = vld [vmem:[%s229 + $0x3d8] sm:$0xff]
        %v388 = vld [vmem:[%s229 + $0x3e0] sm:$0xff]
        %v389 = vld [vmem:[%s229 + $0x3e8] sm:$0xff]
        %v390 = vld [vmem:[%s229 + $0x3f0] sm:$0xff]
        %v391 = vld [vmem:[%s229 + $0x3f8] sm:$0xff]
        %v392 = vld [vmem:[#allocation5] sm:$0xff]
        %v393 = vld [vmem:[#allocation5 + $0x8] sm:$0xff]
        %v394 = vld [vmem:[#allocation5 + $0x10] sm:$0xff]
        %v395 = vld [vmem:[#allocation5 + $0x18] sm:$0xff]
        %v396 = vld [vmem:[#allocation5 + $0x20] sm:$0xff]
        %v397 = vld [vmem:[#allocation5 + $0x28] sm:$0xff]
        %v398 = vld [vmem:[#allocation5 + $0x30] sm:$0xff]
        %v399 = vld [vmem:[#allocation5 + $0x38] sm:$0xff]
        %v400 = vld [vmem:[#allocation5 + $0x40] sm:$0xff]
        %v401 = vld [vmem:[#allocation5 + $0x48] sm:$0xff]
        %v402 = vld [vmem:[#allocation5 + $0x50] sm:$0xff]
        %v403 = vld [vmem:[#allocation5 + $0x58] sm:$0xff]
        %v404 = vld [vmem:[#allocation5 + $0x60] sm:$0xff]
        %v405 = vld [vmem:[#allocation5 + $0x68] sm:$0xff]
        %v406 = vld [vmem:[#allocation5 + $0x70] sm:$0xff]
        %v407 = vld [vmem:[#allocation5 + $0x78] sm:$0xff]
        %v408 = vld [vmem:[#allocation5 + $0x80] sm:$0xff]
        %v409 = vld [vmem:[#allocation5 + $0x88] sm:$0xff]
        %v410 = vld [vmem:[#allocation5 + $0x90] sm:$0xff]
        %v411 = vld [vmem:[#allocation5 + $0x98] sm:$0xff]
        %v412 = vld [vmem:[#allocation5 + $0xa0] sm:$0xff]
        %v413 = vld [vmem:[#allocation5 + $0xa8] sm:$0xff]
        %v414 = vld [vmem:[#allocation5 + $0xb0] sm:$0xff]
        %v415 = vld [vmem:[#allocation5 + $0xb8] sm:$0xff]
        %v416 = vld [vmem:[#allocation5 + $0xc0] sm:$0xff]
        %v417 = vld [vmem:[#allocation5 + $0xc8] sm:$0xff]
        %v418 = vld [vmem:[#allocation5 + $0xd0] sm:$0xff]
        %v419 = vld [vmem:[#allocation5 + $0xd8] sm:$0xff]
        %v420 = vld [vmem:[#allocation5 + $0xe0] sm:$0xff]
        %v421 = vld [vmem:[#allocation5 + $0xe8] sm:$0xff]
        %v422 = vld [vmem:[#allocation5 + $0xf0] sm:$0xff]
        %v423 = vld [vmem:[#allocation5 + $0xf8] sm:$0xff]
        %v424 = vld [vmem:[#allocation7] sm:$0x1]
        %v426 = vlaneseq
        %v427 = vshrl.u32 %v426, 7
        %v428 = vsub.s32 0, %v427
        %v429 = vrot.slane %v424, %v428
        %431 = vmatprep.subr.mxu0 0.0
        %432 = vmatpush1.msra.mxu0 %v392
        %433 = vmatprep.subr.mxu0 0.0
        %434 = vmatpush1.msra.mxu0 %v393
        %435 = vmatprep.subr.mxu0 0.0
        %436 = vmatpush1.msra.mxu0 %v394
        %437 = vmatprep.subr.mxu0 0.0
        %438 = vmatpush1.msra.mxu0 %v395
        %439 = vmatprep.subr.mxu0 0.0
        %440 = vmatpush1.msra.mxu0 %v396
        %441 = vmatprep.subr.mxu0 0.0
        %442 = vmatpush1.msra.mxu0 %v397
        %443 = vmatprep.subr.mxu0 0.0
        %444 = vmatpush1.msra.mxu0 %v398
        %445 = vmatprep.subr.mxu0 0.0
        %446 = vmatpush1.msra.mxu0 %v399
        %447 = vmatprep.subr.mxu0 0.0
        %448 = vmatpush1.msra.mxu0 %v400
        %449 = vmatprep.subr.mxu0 0.0
        %450 = vmatpush1.msra.mxu0 %v401
        %451 = vmatprep.subr.mxu0 0.0
        %452 = vmatpush1.msra.mxu0 %v402
        %453 = vmatprep.subr.mxu0 0.0
        %454 = vmatpush1.msra.mxu0 %v403
        %455 = vmatprep.subr.mxu0 0.0
        %456 = vmatpush1.msra.mxu0 %v404
        %457 = vmatprep.subr.mxu0 0.0
        %458 = vmatpush1.msra.mxu0 %v405
        %459 = vmatprep.subr.mxu0 0.0
        %460 = vmatpush1.msra.mxu0 %v406
        %461 = vmatprep.subr.mxu0 0.0
        %462 = vmatpush1.msra.mxu0 %v407
        %463 = vmatprep.subr.mxu0 0.0
        %464 = vmatpush1.msra.mxu0 %v408
        %465 = vmatprep.subr.mxu0 0.0
        %466 = vmatpush1.msra.mxu0 %v409
        %467 = vmatprep.subr.mxu0 0.0
        %468 = vmatpush1.msra.mxu0 %v410
        %469 = vmatprep.subr.mxu0 0.0
        %470 = vmatpush1.msra.mxu0 %v411
        %471 = vmatprep.subr.mxu0 0.0
        %472 = vmatpush1.msra.mxu0 %v412
        %473 = vmatprep.subr.mxu0 0.0
        %474 = vmatpush1.msra.mxu0 %v413
        %475 = vmatprep.subr.mxu0 0.0
        %476 = vmatpush1.msra.mxu0 %v414
        %477 = vmatprep.subr.mxu0 0.0
        %478 = vmatpush1.msra.mxu0 %v415
        %479 = vmatprep.subr.mxu0 0.0
        %480 = vmatpush1.msra.mxu0 %v416
        %481 = vmatprep.subr.mxu0 0.0
        %482 = vmatpush1.msra.mxu0 %v417
        %483 = vmatprep.subr.mxu0 0.0
        %484 = vmatpush1.msra.mxu0 %v418
        %485 = vmatprep.subr.mxu0 0.0
        %486 = vmatpush1.msra.mxu0 %v419
        %487 = vmatprep.subr.mxu0 0.0
        %488 = vmatpush1.msra.mxu0 %v420
        %489 = vmatprep.subr.mxu0 0.0
        %490 = vmatpush1.msra.mxu0 %v421
        %491 = vmatprep.subr.mxu0 0.0
        %492 = vmatpush1.msra.mxu0 %v422
        %493 = vmatprep.subr.mxu0 0.0
        %494 = vmatpush1.msra.mxu0 %v423
        %495 = vmatprep.mubr.f32.mxu0 %v265
        %496 = vmatmul.mubr.f32.gmra.mrb[0].mxu0 %v264
        %v497 = vpop.f32.mrb[0].mxu0
        %v498 = vadd.f32 %v429, %v497
        %v499 = vpop.f32.mrb[0].mxu0
        %500 = vmatprep.mubr.f32.mxu0 %v267
        %501 = vmatmul.mubr.f32.gmra.mrb[0].mxu0 %v266
        %v502 = vpop.f32.mrb[0].mxu0
        %v503 = vadd.f32 %v429, %v502
        %v504 = vpop.f32.mrb[0].mxu0
        %505 = vmatprep.mubr.f32.mxu0 %v269
        %506 = vmatmul.mubr.f32.gmra.mrb[0].mxu0 %v268
        %v507 = vpop.f32.mrb[0].mxu0
        %v508 = vadd.f32 %v429, %v507
        %v509 = vpop.f32.mrb[0].mxu0
        %510 = vmatprep.mubr.f32.mxu0 %v271
        %511 = vmatmul.mubr.f32.gmra.mrb[0].mxu0 %v270
        %v512 = vpop.f32.mrb[0].mxu0
        %v513 = vadd.f32 %v429, %v512
        %v514 = vpop.f32.mrb[0].mxu0
        %515 = vmatprep.mubr.f32.mxu0 %v273
        %516 = vmatmul.mubr.f32.gmra.mrb[0].mxu0 %v272
        %v517 = vpop.f32.mrb[0].mxu0
        %v518 = vadd.f32 %v429, %v517
        %v519 = vpop.f32.mrb[0].mxu0
        %520 = vmatprep.mubr.f32.mxu0 %v275
        %521 = vmatmul.mubr.f32.gmra.mrb[0].mxu0 %v274
        %v522 = vpop.f32.mrb[0].mxu0
        %v523 = vadd.f32 %v429, %v522
        %v524 = vpop.f32.mrb[0].mxu0
        %525 = vmatprep.mubr.f32.mxu0 %v277
        %526 = vmatmul.mubr.f32.gmra.mrb[0].mxu0 %v276
        %v527 = vpop.f32.mrb[0].mxu0
        %v528 = vadd.f32 %v429, %v527
        %v529 = vpop.f32.mrb[0].mxu0
        %530 = vmatprep.mubr.f32.mxu0 %v279
        %531 = vmatmul.mubr.f32.gmra.mrb[0].mxu0 %v278
        %v532 = vpop.f32.mrb[0].mxu0
        %v533 = vadd.f32 %v429, %v532
        %v534 = vpop.f32.mrb[0].mxu0
        %535 = vmatprep.mubr.f32.mxu0 %v281
        %536 = vmatmul.mubr.f32.gmra.mrb[0].mxu0 %v280
        %v537 = vpop.f32.mrb[0].mxu0
        %v538 = vadd.f32 %v429, %v537
        %v539 = vpop.f32.mrb[0].mxu0
        %540 = vmatprep.mubr.f32.mxu0 %v283
        %541 = vmatmul.mubr.f32.gmra.mrb[0].mxu0 %v282
        %v542 = vpop.f32.mrb[0].mxu0
        %v543 = vadd.f32 %v429, %v542
        %v544 = vpop.f32.mrb[0].mxu0
        %545 = vmatprep.mubr.f32.mxu0 %v285
        %546 = vmatmul.mubr.f32.gmra.mrb[0].mxu0 %v284
        %v547 = vpop.f32.mrb[0].mxu0
        %v548 = vadd.f32 %v429, %v547
        %v549 = vpop.f32.mrb[0].mxu0
        %550 = vmatprep.mubr.f32.mxu0 %v287
        %551 = vmatmul.mubr.f32.gmra.mrb[0].mxu0 %v286
        %v552 = vpop.f32.mrb[0].mxu0
        %v553 = vadd.f32 %v429, %v552
        %v554 = vpop.f32.mrb[0].mxu0
        %555 = vmatprep.mubr.f32.mxu0 %v289
        %556 = vmatmul.mubr.f32.gmra.mrb[0].mxu0 %v288
        %v557 = vpop.f32.mrb[0].mxu0
        %v558 = vadd.f32 %v429, %v557
        %v559 = vpop.f32.mrb[0].mxu0
        %560 = vmatprep.mubr.f32.mxu0 %v291
        %561 = vmatmul.mubr.f32.gmra.mrb[0].mxu0 %v290
        %v562 = vpop.f32.mrb[0].mxu0
        %v563 = vadd.f32 %v429, %v562
        %v564 = vpop.f32.mrb[0].mxu0
        %565 = vmatprep.mubr.f32.mxu0 %v293
        %566 = vmatmul.mubr.f32.gmra.mrb[0].mxu0 %v292
        %v567 = vpop.f32.mrb[0].mxu0
        %v568 = vadd.f32 %v429, %v567
        %v569 = vpop.f32.mrb[0].mxu0
        %570 = vmatprep.mubr.f32.mxu0 %v295
        %571 = vmatmul.mubr.f32.gmra.mrb[0].mxu0 %v294
        %v572 = vpop.f32.mrb[0].mxu0
        %v573 = vadd.f32 %v429, %v572
        %v574 = vpop.f32.mrb[0].mxu0
        %575 = vmatprep.mubr.f32.mxu0 %v297
        %576 = vmatmul.mubr.f32.gmra.mrb[0].mxu0 %v296
        %v577 = vpop.f32.mrb[0].mxu0
        %v578 = vadd.f32 %v429, %v577
        %v579 = vpop.f32.mrb[0].mxu0
        %580 = vmatprep.mubr.f32.mxu0 %v299
        %581 = vmatmul.mubr.f32.gmra.mrb[0].mxu0 %v298
        %v582 = vpop.f32.mrb[0].mxu0
        %v583 = vadd.f32 %v429, %v582
        %v584 = vpop.f32.mrb[0].mxu0
        %585 = vmatprep.mubr.f32.mxu0 %v301
        %586 = vmatmul.mubr.f32.gmra.mrb[0].mxu0 %v300
        %v587 = vpop.f32.mrb[0].mxu0
        %v588 = vadd.f32 %v429, %v587
        %v589 = vpop.f32.mrb[0].mxu0
        %590 = vmatprep.mubr.f32.mxu0 %v303
        %591 = vmatmul.mubr.f32.gmra.mrb[0].mxu0 %v302
        %v592 = vpop.f32.mrb[0].mxu0
        %v593 = vadd.f32 %v429, %v592
        %v594 = vpop.f32.mrb[0].mxu0
        %595 = vmatprep.mubr.f32.mxu0 %v305
        %596 = vmatmul.mubr.f32.gmra.mrb[0].mxu0 %v304
        %v597 = vpop.f32.mrb[0].mxu0
        %v598 = vadd.f32 %v429, %v597
        %v599 = vpop.f32.mrb[0].mxu0
        %600 = vmatprep.mubr.f32.mxu0 %v307
        %601 = vmatmul.mubr.f32.gmra.mrb[0].mxu0 %v306
        %v602 = vpop.f32.mrb[0].mxu0
        %v603 = vadd.f32 %v429, %v602
        %v604 = vpop.f32.mrb[0].mxu0
        %605 = vmatprep.mubr.f32.mxu0 %v309
        %606 = vmatmul.mubr.f32.gmra.mrb[0].mxu0 %v308
        %v607 = vpop.f32.mrb[0].mxu0
        %v608 = vadd.f32 %v429, %v607
        %v609 = vpop.f32.mrb[0].mxu0
        %610 = vmatprep.mubr.f32.mxu0 %v311
        %611 = vmatmul.mubr.f32.gmra.mrb[0].mxu0 %v310
        %v612 = vpop.f32.mrb[0].mxu0
        %v613 = vadd.f32 %v429, %v612
        %v614 = vpop.f32.mrb[0].mxu0
        %615 = vmatprep.mubr.f32.mxu0 %v313
        %616 = vmatmul.mubr.f32.gmra.mrb[0].mxu0 %v312
        %v617 = vpop.f32.mrb[0].mxu0
        %v618 = vadd.f32 %v429, %v617
        %v619 = vpop.f32.mrb[0].mxu0
        %620 = vmatprep.mubr.f32.mxu0 %v315
        %621 = vmatmul.mubr.f32.gmra.mrb[0].mxu0 %v314
        %v622 = vpop.f32.mrb[0].mxu0
        %v623 = vadd.f32 %v429, %v622
        %v624 = vpop.f32.mrb[0].mxu0
        %625 = vmatprep.mubr.f32.mxu0 %v317
        %626 = vmatmul.mubr.f32.gmra.mrb[0].mxu0 %v316
        %v627 = vpop.f32.mrb[0].mxu0
        %v628 = vadd.f32 %v429, %v627
        %v629 = vpop.f32.mrb[0].mxu0
        %630 = vmatprep.mubr.f32.mxu0 %v319
        %631 = vmatmul.mubr.f32.gmra.mrb[0].mxu0 %v318
        %v632 = vpop.f32.mrb[0].mxu0
        %v633 = vadd.f32 %v429, %v632
        %v634 = vpop.f32.mrb[0].mxu0
        %635 = vmatprep.mubr.f32.mxu0 %v321
        %636 = vmatmul.mubr.f32.gmra.mrb[0].mxu0 %v320
        %v637 = vpop.f32.mrb[0].mxu0
        %v638 = vadd.f32 %v429, %v637
        %v639 = vpop.f32.mrb[0].mxu0
        %640 = vmatprep.mubr.f32.mxu0 %v323
        %641 = vmatmul.mubr.f32.gmra.mrb[0].mxu0 %v322
        %v642 = vpop.f32.mrb[0].mxu0
        %v643 = vadd.f32 %v429, %v642
        %v644 = vpop.f32.mrb[0].mxu0
        %645 = vmatprep.mubr.f32.mxu0 %v325
        %646 = vmatmul.mubr.f32.gmra.mrb[0].mxu0 %v324
        %v647 = vpop.f32.mrb[0].mxu0
        %v648 = vadd.f32 %v429, %v647
        %v649 = vpop.f32.mrb[0].mxu0
        %650 = vmatprep.mubr.f32.mxu0 %v327
        %651 = vmatmul.mubr.f32.gmra.mrb[0].mxu0 %v326
        %v652 = vpop.f32.mrb[0].mxu0
        %v653 = vadd.f32 %v429, %v652
        %v654 = vpop.f32.mrb[0].mxu0
        %655 = vmatprep.mubr.f32.mxu0 %v329
        %656 = vmatmul.mubr.f32.gmra.mrb[0].mxu0 %v328
        %v657 = vpop.f32.mrb[0].mxu0
        %v658 = vadd.f32 %v429, %v657
        %v659 = vpop.f32.mrb[0].mxu0
        %660 = vmatprep.mubr.f32.mxu0 %v331
        %661 = vmatmul.mubr.f32.gmra.mrb[0].mxu0 %v330
        %v662 = vpop.f32.mrb[0].mxu0
        %v663 = vadd.f32 %v429, %v662
        %v664 = vpop.f32.mrb[0].mxu0
        %665 = vmatprep.mubr.f32.mxu0 %v333
        %666 = vmatmul.mubr.f32.gmra.mrb[0].mxu0 %v332
        %v667 = vpop.f32.mrb[0].mxu0
        %v668 = vadd.f32 %v429, %v667
        %v669 = vpop.f32.mrb[0].mxu0
        %670 = vmatprep.mubr.f32.mxu0 %v335
        %671 = vmatmul.mubr.f32.gmra.mrb[0].mxu0 %v334
        %v672 = vpop.f32.mrb[0].mxu0
        %v673 = vadd.f32 %v429, %v672
        %v674 = vpop.f32.mrb[0].mxu0
        %675 = vmatprep.mubr.f32.mxu0 %v337
        %676 = vmatmul.mubr.f32.gmra.mrb[0].mxu0 %v336
        %v677 = vpop.f32.mrb[0].mxu0
        %v678 = vadd.f32 %v429, %v677
        %v679 = vpop.f32.mrb[0].mxu0
        %680 = vmatprep.mubr.f32.mxu0 %v339
        %681 = vmatmul.mubr.f32.gmra.mrb[0].mxu0 %v338
        %v682 = vpop.f32.mrb[0].mxu0
        %v683 = vadd.f32 %v429, %v682
        %v684 = vpop.f32.mrb[0].mxu0
        %685 = vmatprep.mubr.f32.mxu0 %v341
        %686 = vmatmul.mubr.f32.gmra.mrb[0].mxu0 %v340
        %v687 = vpop.f32.mrb[0].mxu0
        %v688 = vadd.f32 %v429, %v687
        %v689 = vpop.f32.mrb[0].mxu0
        %690 = vmatprep.mubr.f32.mxu0 %v343
        %691 = vmatmul.mubr.f32.gmra.mrb[0].mxu0 %v342
        %v692 = vpop.f32.mrb[0].mxu0
        %v693 = vadd.f32 %v429, %v692
        %v694 = vpop.f32.mrb[0].mxu0
        %695 = vmatprep.mubr.f32.mxu0 %v345
        %696 = vmatmul.mubr.f32.gmra.mrb[0].mxu0 %v344
        %v697 = vpop.f32.mrb[0].mxu0
        %v698 = vadd.f32 %v429, %v697
        %v699 = vpop.f32.mrb[0].mxu0
        %700 = vmatprep.mubr.f32.mxu0 %v347
        %701 = vmatmul.mubr.f32.gmra.mrb[0].mxu0 %v346
        %v702 = vpop.f32.mrb[0].mxu0
        %v703 = vadd.f32 %v429, %v702
        %v704 = vpop.f32.mrb[0].mxu0
        %705 = vmatprep.mubr.f32.mxu0 %v349
        %706 = vmatmul.mubr.f32.gmra.mrb[0].mxu0 %v348
        %v707 = vpop.f32.mrb[0].mxu0
        %v708 = vadd.f32 %v429, %v707
        %v709 = vpop.f32.mrb[0].mxu0
        %710 = vmatprep.mubr.f32.mxu0 %v351
        %711 = vmatmul.mubr.f32.gmra.mrb[0].mxu0 %v350
        %v712 = vpop.f32.mrb[0].mxu0
        %v713 = vadd.f32 %v429, %v712
        %v714 = vpop.f32.mrb[0].mxu0
        %715 = vmatprep.mubr.f32.mxu0 %v353
        %716 = vmatmul.mubr.f32.gmra.mrb[0].mxu0 %v352
        %v717 = vpop.f32.mrb[0].mxu0
        %v718 = vadd.f32 %v429, %v717
        %v719 = vpop.f32.mrb[0].mxu0
        %720 = vmatprep.mubr.f32.mxu0 %v355
        %721 = vmatmul.mubr.f32.gmra.mrb[0].mxu0 %v354
        %v722 = vpop.f32.mrb[0].mxu0
        %v723 = vadd.f32 %v429, %v722
        %v724 = vpop.f32.mrb[0].mxu0
        %725 = vmatprep.mubr.f32.mxu0 %v357
        %726 = vmatmul.mubr.f32.gmra.mrb[0].mxu0 %v356
        %v727 = vpop.f32.mrb[0].mxu0
        %v728 = vadd.f32 %v429, %v727
        %v729 = vpop.f32.mrb[0].mxu0
        %730 = vmatprep.mubr.f32.mxu0 %v359
        %731 = vmatmul.mubr.f32.gmra.mrb[0].mxu0 %v358
        %v732 = vpop.f32.mrb[0].mxu0
        %v733 = vadd.f32 %v429, %v732
        %v734 = vpop.f32.mrb[0].mxu0
        %735 = vmatprep.mubr.f32.mxu0 %v361
        %736 = vmatmul.mubr.f32.gmra.mrb[0].mxu0 %v360
        %v737 = vpop.f32.mrb[0].mxu0
        %v738 = vadd.f32 %v429, %v737
        %v739 = vpop.f32.mrb[0].mxu0
        %740 = vmatprep.mubr.f32.mxu0 %v363
        %741 = vmatmul.mubr.f32.gmra.mrb[0].mxu0 %v362
        %v742 = vpop.f32.mrb[0].mxu0
        %v743 = vadd.f32 %v429, %v742
        %v744 = vpop.f32.mrb[0].mxu0
        %745 = vmatprep.mubr.f32.mxu0 %v365
        %746 = vmatmul.mubr.f32.gmra.mrb[0].mxu0 %v364
        %v747 = vpop.f32.mrb[0].mxu0
        %v748 = vadd.f32 %v429, %v747
        %v749 = vpop.f32.mrb[0].mxu0
        %750 = vmatprep.mubr.f32.mxu0 %v367
        %751 = vmatmul.mubr.f32.gmra.mrb[0].mxu0 %v366
        %v752 = vpop.f32.mrb[0].mxu0
        %v753 = vadd.f32 %v429, %v752
        %v754 = vpop.f32.mrb[0].mxu0
        %755 = vmatprep.mubr.f32.mxu0 %v369
        %756 = vmatmul.mubr.f32.gmra.mrb[0].mxu0 %v368
        %v757 = vpop.f32.mrb[0].mxu0
        %v758 = vadd.f32 %v429, %v757
        %v759 = vpop.f32.mrb[0].mxu0
        %760 = vmatprep.mubr.f32.mxu0 %v371
        %761 = vmatmul.mubr.f32.gmra.mrb[0].mxu0 %v370
        %v762 = vpop.f32.mrb[0].mxu0
        %v763 = vadd.f32 %v429, %v762
        %v764 = vpop.f32.mrb[0].mxu0
        %765 = vmatprep.mubr.f32.mxu0 %v373
        %766 = vmatmul.mubr.f32.gmra.mrb[0].mxu0 %v372
        %v767 = vpop.f32.mrb[0].mxu0
        %v768 = vadd.f32 %v429, %v767
        %v769 = vpop.f32.mrb[0].mxu0
        %770 = vmatprep.mubr.f32.mxu0 %v375
        %771 = vmatmul.mubr.f32.gmra.mrb[0].mxu0 %v374
        %v772 = vpop.f32.mrb[0].mxu0
        %v773 = vadd.f32 %v429, %v772
        %v774 = vpop.f32.mrb[0].mxu0
        %775 = vmatprep.mubr.f32.mxu0 %v377
        %776 = vmatmul.mubr.f32.gmra.mrb[0].mxu0 %v376
        %v777 = vpop.f32.mrb[0].mxu0
        %v778 = vadd.f32 %v429, %v777
        %v779 = vpop.f32.mrb[0].mxu0
        %780 = vmatprep.mubr.f32.mxu0 %v379
        %781 = vmatmul.mubr.f32.gmra.mrb[0].mxu0 %v378
        %v782 = vpop.f32.mrb[0].mxu0
        %v783 = vadd.f32 %v429, %v782
        %v784 = vpop.f32.mrb[0].mxu0
        %785 = vmatprep.mubr.f32.mxu0 %v381
        %786 = vmatmul.mubr.f32.gmra.mrb[0].mxu0 %v380
        %v787 = vpop.f32.mrb[0].mxu0
        %v788 = vadd.f32 %v429, %v787
        %v789 = vpop.f32.mrb[0].mxu0
        %790 = vmatprep.mubr.f32.mxu0 %v383
        %791 = vmatmul.mubr.f32.gmra.mrb[0].mxu0 %v382
        %v792 = vpop.f32.mrb[0].mxu0
        %v793 = vadd.f32 %v429, %v792
        %v794 = vpop.f32.mrb[0].mxu0
        %795 = vmatprep.mubr.f32.mxu0 %v385
        %796 = vmatmul.mubr.f32.gmra.mrb[0].mxu0 %v384
        %v797 = vpop.f32.mrb[0].mxu0
        %v798 = vadd.f32 %v429, %v797
        %v799 = vpop.f32.mrb[0].mxu0
        %800 = vmatprep.mubr.f32.mxu0 %v387
        %801 = vmatmul.mubr.f32.gmra.mrb[0].mxu0 %v386
        %v802 = vpop.f32.mrb[0].mxu0
        %v803 = vadd.f32 %v429, %v802
        %v804 = vpop.f32.mrb[0].mxu0
        %805 = vmatprep.mubr.f32.mxu0 %v389
        %806 = vmatmul.mubr.f32.gmra.mrb[0].mxu0 %v388
        %v807 = vpop.f32.mrb[0].mxu0
        %v808 = vadd.f32 %v429, %v807
        %v809 = vpop.f32.mrb[0].mxu0
        %810 = vmatprep.mubr.f32.mxu0 %v391
        %811 = vmatmul.mubr.f32.gmra.mrb[0].mxu0 %v390
        %v812 = vpop.f32.mrb[0].mxu0
        %v813 = vadd.f32 %v429, %v812
        %v814 = vpop.f32.mrb[0].mxu0
        %815 = vdwg.mxu0
        %v816 = vmax.f32 %v498, 0.0
        %v817 = vmax.f32 %v503, 0.0
        %v818 = vmax.f32 %v508, 0.0
        %v819 = vmax.f32 %v513, 0.0
        %v820 = vmax.f32 %v518, 0.0
        %v821 = vmax.f32 %v523, 0.0
        %v822 = vmax.f32 %v528, 0.0
        %v823 = vmax.f32 %v533, 0.0
        %v824 = vmax.f32 %v538, 0.0
        %v825 = vmax.f32 %v543, 0.0
        %v826 = vmax.f32 %v548, 0.0
        %v827 = vmax.f32 %v553, 0.0
        %v828 = vmax.f32 %v558, 0.0
        %v829 = vmax.f32 %v563, 0.0
        %v830 = vmax.f32 %v568, 0.0
        %v831 = vmax.f32 %v573, 0.0
        %v832 = vmax.f32 %v578, 0.0
        %v833 = vmax.f32 %v583, 0.0
        %v834 = vmax.f32 %v588, 0.0
        %v835 = vmax.f32 %v593, 0.0
        %v836 = vmax.f32 %v598, 0.0
        %v837 = vmax.f32 %v603, 0.0
        %v838 = vmax.f32 %v608, 0.0
        %v839 = vmax.f32 %v613, 0.0
        %v840 = vmax.f32 %v618, 0.0
        %v841 = vmax.f32 %v623, 0.0
        %v842 = vmax.f32 %v628, 0.0
        %v843 = vmax.f32 %v633, 0.0
        %v844 = vmax.f32 %v638, 0.0
        %v845 = vmax.f32 %v643, 0.0
        %v846 = vmax.f32 %v648, 0.0
        %v847 = vmax.f32 %v653, 0.0
        %v848 = vmax.f32 %v658, 0.0
        %v849 = vmax.f32 %v663, 0.0
        %v850 = vmax.f32 %v668, 0.0
        %v851 = vmax.f32 %v673, 0.0
        %v852 = vmax.f32 %v678, 0.0
        %v853 = vmax.f32 %v683, 0.0
        %v854 = vmax.f32 %v688, 0.0
        %v855 = vmax.f32 %v693, 0.0
        %v856 = vmax.f32 %v698, 0.0
        %v857 = vmax.f32 %v703, 0.0
        %v858 = vmax.f32 %v708, 0.0
        %v859 = vmax.f32 %v713, 0.0
        %v860 = vmax.f32 %v718, 0.0
        %v861 = vmax.f32 %v723, 0.0
        %v862 = vmax.f32 %v728, 0.0
        %v863 = vmax.f32 %v733, 0.0
        %v864 = vmax.f32 %v738, 0.0
        %v865 = vmax.f32 %v743, 0.0
        %v866 = vmax.f32 %v748, 0.0
        %v867 = vmax.f32 %v753, 0.0
        %v868 = vmax.f32 %v758, 0.0
        %v869 = vmax.f32 %v763, 0.0
        %v870 = vmax.f32 %v768, 0.0
        %v871 = vmax.f32 %v773, 0.0
        %v872 = vmax.f32 %v778, 0.0
        %v873 = vmax.f32 %v783, 0.0
        %v874 = vmax.f32 %v788, 0.0
        %v875 = vmax.f32 %v793, 0.0
        %v876 = vmax.f32 %v798, 0.0
        %v877 = vmax.f32 %v803, 0.0
        %v878 = vmax.f32 %v808, 0.0
        %v879 = vmax.f32 %v813, 0.0
        %880 = vst [vmem:[%s259] sm:$0xff] %v816
        %881 = vst [vmem:[%s259 + $0x8] sm:$0xff] %v817
        %882 = vst [vmem:[%s259 + $0x10] sm:$0xff] %v818
        %883 = vst [vmem:[%s259 + $0x18] sm:$0xff] %v819
        %884 = vst [vmem:[%s259 + $0x20] sm:$0xff] %v820
        %885 = vst [vmem:[%s259 + $0x28] sm:$0xff] %v821
        %886 = vst [vmem:[%s259 + $0x30] sm:$0xff] %v822
        %887 = vst [vmem:[%s259 + $0x38] sm:$0xff] %v823
        %888 = vst [vmem:[%s259 + $0x40] sm:$0xff] %v824
        %889 = vst [vmem:[%s259 + $0x48] sm:$0xff] %v825
        %890 = vst [vmem:[%s259 + $0x50] sm:$0xff] %v826
        %891 = vst [vmem:[%s259 + $0x58] sm:$0xff] %v827
        %892 = vst [vmem:[%s259 + $0x60] sm:$0xff] %v828
        %893 = vst [vmem:[%s259 + $0x68] sm:$0xff] %v829
        %894 = vst [vmem:[%s259 + $0x70] sm:$0xff] %v830
        %895 = vst [vmem:[%s259 + $0x78] sm:$0xff] %v831
        %896 = vst [vmem:[%s259 + $0x80] sm:$0xff] %v832
        %897 = vst [vmem:[%s259 + $0x88] sm:$0xff] %v833
        %898 = vst [vmem:[%s259 + $0x90] sm:$0xff] %v834
        %899 = vst [vmem:[%s259 + $0x98] sm:$0xff] %v835
        %900 = vst [vmem:[%s259 + $0xa0] sm:$0xff] %v836
        %901 = vst [vmem:[%s259 + $0xa8] sm:$0xff] %v837
        %902 = vst [vmem:[%s259 + $0xb0] sm:$0xff] %v838
        %903 = vst [vmem:[%s259 + $0xb8] sm:$0xff] %v839
        %904 = vst [vmem:[%s259 + $0xc0] sm:$0xff] %v840
        %905 = vst [vmem:[%s259 + $0xc8] sm:$0xff] %v841
        %906 = vst [vmem:[%s259 + $0xd0] sm:$0xff] %v842
        %907 = vst [vmem:[%s259 + $0xd8] sm:$0xff] %v843
        %908 = vst [vmem:[%s259 + $0xe0] sm:$0xff] %v844
        %909 = vst [vmem:[%s259 + $0xe8] sm:$0xff] %v845
        %910 = vst [vmem:[%s259 + $0xf0] sm:$0xff] %v846
        %911 = vst [vmem:[%s259 + $0xf8] sm:$0xff] %v847
        %912 = vst [vmem:[%s259 + $0x100] sm:$0xff] %v848
        %913 = vst [vmem:[%s259 + $0x108] sm:$0xff] %v849
        %914 = vst [vmem:[%s259 + $0x110] sm:$0xff] %v850
        %915 = vst [vmem:[%s259 + $0x118] sm:$0xff] %v851
        %916 = vst [vmem:[%s259 + $0x120] sm:$0xff] %v852
        %917 = vst [vmem:[%s259 + $0x128] sm:$0xff] %v853
        %918 = vst [vmem:[%s259 + $0x130] sm:$0xff] %v854
        %919 = vst [vmem:[%s259 + $0x138] sm:$0xff] %v855
        %920 = vst [vmem:[%s259 + $0x140] sm:$0xff] %v856
        %921 = vst [vmem:[%s259 + $0x148] sm:$0xff] %v857
        %922 = vst [vmem:[%s259 + $0x150] sm:$0xff] %v858
        %923 = vst [vmem:[%s259 + $0x158] sm:$0xff] %v859
        %924 = vst [vmem:[%s259 + $0x160] sm:$0xff] %v860
        %925 = vst [vmem:[%s259 + $0x168] sm:$0xff] %v861
        %926 = vst [vmem:[%s259 + $0x170] sm:$0xff] %v862
        %927 = vst [vmem:[%s259 + $0x178] sm:$0xff] %v863
        %928 = vst [vmem:[%s259 + $0x180] sm:$0xff] %v864
        %929 = vst [vmem:[%s259 + $0x188] sm:$0xff] %v865
        %930 = vst [vmem:[%s259 + $0x190] sm:$0xff] %v866
        %931 = vst [vmem:[%s259 + $0x198] sm:$0xff] %v867
        %932 = vst [vmem:[%s259 + $0x1a0] sm:$0xff] %v868
        %933 = vst [vmem:[%s259 + $0x1a8] sm:$0xff] %v869
        %934 = vst [vmem:[%s259 + $0x1b0] sm:$0xff] %v870
        %935 = vst [vmem:[%s259 + $0x1b8] sm:$0xff] %v871
        %936 = vst [vmem:[%s259 + $0x1c0] sm:$0xff] %v872
        %937 = vst [vmem:[%s259 + $0x1c8] sm:$0xff] %v873
        %938 = vst [vmem:[%s259 + $0x1d0] sm:$0xff] %v874
        %939 = vst [vmem:[%s259 + $0x1d8] sm:$0xff] %v875
        %940 = vst [vmem:[%s259 + $0x1e0] sm:$0xff] %v876
        %941 = vst [vmem:[%s259 + $0x1e8] sm:$0xff] %v877
        %942 = vst [vmem:[%s259 + $0x1f0] sm:$0xff] %v878
        %943 = vst [vmem:[%s259 + $0x1f8] sm:$0xff] %v879
        %s944 = sand.u32 %s132, 1
        %s945 = scalar_lea.sflag [#allocation4], %s944
        %s946 = sand.u32 %s132, 1
        %s947 = smul.addr %s946, 512
        %s948 = scalar_lea.vmem [#allocation8], %s947
        // Predicated region
        $region45: #{tpu_custom_call.1} parent=31 // pred_check
          %p949 = pneg %p142
        $region46: #{tpu_custom_call.1} parent=31 // pred_check_branch
          %951 = sbr.rel (%p949) target = $region48
        $region47: #{tpu_custom_call.1} parent=31 // pred_region
          %s952 = smul.u32 64, %s26
          %s954 = ssub.s32 8192, 8192
          %955 = vsyncadd %s945, %s954
          %s956 = sadd.s32 %s27, %s952
          %s957 = smul.addr %s956, 128
          %s958 = scalar_lea.hbm %s3, %s957
          %s959 = sshll.u32 %s948, 4
          %s960 = int_to_ptr.vmem [resolvable:$true] %s959
          %965 = dma.vmem_to_hbm [thread:$0]  %s960, 8192, %s958, %s945, 128, 128, 8
        $region48: #{tpu_custom_call.1} parent=31 // pred_fallthru
          _
      $region32: #{tpu_custom_call.1} parent=5 // pred_fallthru
        _
      %p966 = scmp.le.s32.totalorder 2, %s16
      // Predicated region
      $region49: #{tpu_custom_call.1} parent=5 // pred_check
        %p967 = pneg %p966
      $region50: #{tpu_custom_call.1} parent=5 // pred_check_branch
        %969 = sbr.rel (%p967) target = $region52
      $region51: #{tpu_custom_call.1} parent=5 // pred_region
        %s970 = ssub.s32 %s16, 2
        // Predicated region
        $region53: #{tpu_custom_call.1} parent=51 // pred_check
          %p971 = pneg %p148
        $region54: #{tpu_custom_call.1} parent=51 // pred_check_branch
          %973 = sbr.rel (%p971) target = $region56
        $region55: #{tpu_custom_call.1} parent=51 // pred_region
          %s974 = sand.u32 %s133, 1
          %s975 = scalar_lea.sflag [#allocation4], %s974
          %s976 = sand.u32 %s133, 1
          %s977 = smul.addr %s976, 512
          %s978 = scalar_lea.vmem [#allocation8], %s977
          %979 = dma.done %s975, 8192
        $region56: #{tpu_custom_call.1} parent=51 // pred_fallthru
          _
      $region52: #{tpu_custom_call.1} parent=5 // pred_fallthru
        _
    $region6: #{tpu_custom_call.1} parent=1 // loop_footer
      %s20 = sadd.s32 1, %s16
    $region7: #{tpu_custom_call.1} parent=1 // loop_footer_branch
      %15 = sbr.rel target = $region3
    $region8: #{tpu_custom_call.1} parent=1 // loop_exit
      _
    %980 = vsyncpa [#allocation3], 1
    %s981 = scalar_lea.sflag [#allocation3], 1
    %982 = vsyncpa %s981, 1
    %983 = vsyncpa [#allocation6], 1
    %984 = vsyncpa [#allocation4], 1
    %s985 = scalar_lea.sflag [#allocation4], 1
    %986 = vsyncpa %s985, 1

</llo_original>
